<compile_context>
chip_gen: v7x
topology: tpu7x:2x2x1
jax: 0.10.0
libtpu: 0.0.40
codegen_flags: <defaults>
</compile_context>

<pallas_src>
import functools

import jax
import jax.numpy as jnp
from jax.experimental import pallas as pl
from jax.experimental.pallas import tpu as pltpu


def _cdiv(a, b):
    return (a + b - 1) // b


def _round_up(n, m):
    return _cdiv(n, m) * m


def linear_kernel(params_ref, xt_ref, ot_ref):
    """params_ref: SMEM (out_f*in_f + out_f,) = [W row-major, b] scalar table.
       xt_ref    : VMEM (in_f, TBL)  -- one input feature per sublane row, batch on lanes.
       ot_ref    : VMEM (out_f, TBL) -- lane-dense output tile."""
    in_f = xt_ref.shape[0]
    out_f = ot_ref.shape[0]
    for n in range(out_f):                                   # out_f == 2, static -> unrolled
        acc = xt_ref[0:1, :] * params_ref[n * in_f + 0]      # scalar (sreg) * vector
        for k in range(1, in_f):                             # in_f == 3, static -> unrolled
            acc = acc + xt_ref[k:k + 1, :] * params_ref[n * in_f + k]
        acc = acc + params_ref[out_f * in_f + n]             # bias (scalar broadcast)
        ot_ref[n:n + 1, :] = acc.astype(ot_ref.dtype)


@functools.partial(jax.jit, static_argnames=("block_b", "force_kernel"))
def net_forward(x, weight, bias, *, block_b=131072, force_kernel=False):
    """x: (B, in_f) f32; weight: (out_f, in_f) f32; bias: (out_f,) f32 -> (B, out_f) f32."""
    B, in_f = x.shape
    out_f = weight.shape[0]

    # Small-B fast path: fixed pallas_call + DMA setup cost dominates there and
    # XLA's fused GEMV wins outright.
    if not force_kernel and B < 1024:
        return x @ weight.T + bias

    # Balanced lane tiles: >= 2 grid steps once B is large enough (v7x megacore),
    # padding capped at <128 dead lanes per tile.
    min_steps = 2 if B >= 256 else 1
    n_steps = max(min_steps, _cdiv(B, block_b))
    tb = _round_up(_cdiv(B, n_steps), 128)
    padded_b = n_steps * tb

    # Lane-dense transposed problem: batch lives on the lane axis.
    xt = x.T                                                  # (in_f, B)
    if padded_b != B:
        xt = jnp.pad(xt, ((0, 0), (0, padded_b - B)))

    # Flat scalar parameter table for SMEM: [W (out_f, in_f) row-major, bias].
    params = jnp.concatenate([weight.reshape(-1), bias.reshape(-1)])

    yt = pl.pallas_call(
        linear_kernel,
        out_shape=jax.ShapeDtypeStruct((out_f, padded_b), x.dtype),
        grid=(n_steps,),
        in_specs=[
            # 8 scalars, resident in SMEM for the whole call.
            pl.BlockSpec(memory_space=pltpu.MemorySpace.SMEM),
            # Lane-dense batch tiles, auto-pipelined across the grid.
            pl.BlockSpec((in_f, tb), lambda i: (0, i)),
        ],
        out_specs=pl.BlockSpec((out_f, tb), lambda i: (0, i)),
        compiler_params=pltpu.CompilerParams(dimension_semantics=("parallel",)),
    )(params, xt)

    y = yt.T                                                  # (padded_b, out_f)
    return y if padded_b == B else y[:B]


if __name__ == "__main__":
    key = jax.random.PRNGKey(0)
    kw, kb, kx1, kx2, kx3 = jax.random.split(key, 5)

    in_f, out_f = 3, 2
    # Deterministic init mimicking PyTorch Linear default: U(-1/sqrt(in_f), 1/sqrt(in_f)).
    bound = 1.0 / (in_f ** 0.5)
    weight = jax.random.uniform(kw, (out_f, in_f), jnp.float32, -bound, bound)
    bias = jax.random.uniform(kb, (out_f,), jnp.float32, -bound, bound)

    # 1) Small batch from the spec, forced through the Pallas kernel path.
    B1 = 8
    x1 = jax.random.normal(kx1, (B1, in_f), jnp.float32)
    y1 = net_forward(x1, weight, bias, force_kernel=True)
    jax.block_until_ready(y1)
    assert y1.shape == (B1, out_f)
    assert jnp.allclose(y1, x1 @ weight.T + bias, atol=1e-5, rtol=1e-5)

    # 2) Small batch through the fast path (plain fused GEMV).
    B2 = 300
    x2 = jax.random.normal(kx2, (B2, in_f), jnp.float32)
    y2 = net_forward(x2, weight, bias)
    jax.block_until_ready(y2)
    assert y2.shape == (B2, out_f)
    assert jnp.allclose(y2, x2 @ weight.T + bias, atol=1e-5, rtol=1e-5)

    # 3) Larger, non-multiple-of-128 batch: multi-step grid + lane-padding path.
    B3 = 4099
    x3 = jax.random.normal(kx3, (B3, in_f), jnp.float32)
    y3 = net_forward(x3, weight, bias)
    jax.block_until_ready(y3)
    assert y3.shape == (B3, out_f)
    assert jnp.allclose(y3, x3 @ weight.T + bias, atol=1e-5, rtol=1e-5)

    print("KERNEL_OK")
</pallas_src>

<mosaic_0001>
module attributes {stable_mosaic.version = 11 : i64} {
  func.func @linear_kernel(%arg0: i32, %arg1: memref<8xf32, #tpu.memory_space<smem>>, %arg2: memref<3x128xf32, #tpu.memory_space<vmem>>, %arg3: memref<2x128xf32, #tpu.memory_space<vmem>>) attributes {dimension_semantics = [#tpu.dimension_semantics<parallel>], iteration_bounds = array<i64: 1>, scalar_prefetch = 0 : i64, scratch_operands = 0 : i64, tpu.core_type = #tpu.core_type<tc>, window_params = [{transform_indices = @transform_0, window_bounds = array<i64: 8>}, {transform_indices = @transform_1, window_bounds = array<i64: 3, 128>}, {transform_indices = @transform_2, window_bounds = array<i64: 2, 128>}]} {
    %c0 = arith.constant 0 : index
    %c0_0 = arith.constant 0 : index
    %0 = vector.load %arg2[%c0, %c0_0] : memref<3x128xf32, #tpu.memory_space<vmem>>, vector<1x128xf32>
    %c0_1 = arith.constant 0 : index
    %1 = memref.load %arg1[%c0_1] : memref<8xf32, #tpu.memory_space<smem>>
    %2 = vector.broadcast %1 : f32 to vector<1x128xf32>
    %3 = arith.mulf %0, %2 : vector<1x128xf32>
    %c1 = arith.constant 1 : index
    %c0_2 = arith.constant 0 : index
    %4 = vector.load %arg2[%c1, %c0_2] : memref<3x128xf32, #tpu.memory_space<vmem>>, vector<1x128xf32>
    %c1_3 = arith.constant 1 : index
    %5 = memref.load %arg1[%c1_3] : memref<8xf32, #tpu.memory_space<smem>>
    %6 = vector.broadcast %5 : f32 to vector<1x128xf32>
    %7 = arith.mulf %4, %6 : vector<1x128xf32>
    %8 = arith.addf %3, %7 : vector<1x128xf32>
    %c2 = arith.constant 2 : index
    %c0_4 = arith.constant 0 : index
    %9 = vector.load %arg2[%c2, %c0_4] : memref<3x128xf32, #tpu.memory_space<vmem>>, vector<1x128xf32>
    %c2_5 = arith.constant 2 : index
    %10 = memref.load %arg1[%c2_5] : memref<8xf32, #tpu.memory_space<smem>>
    %11 = vector.broadcast %10 : f32 to vector<1x128xf32>
    %12 = arith.mulf %9, %11 : vector<1x128xf32>
    %13 = arith.addf %8, %12 : vector<1x128xf32>
    %c6 = arith.constant 6 : index
    %14 = memref.load %arg1[%c6] : memref<8xf32, #tpu.memory_space<smem>>
    %15 = vector.broadcast %14 : f32 to vector<1x128xf32>
    %16 = arith.addf %13, %15 : vector<1x128xf32>
    %c0_6 = arith.constant 0 : index
    %c0_7 = arith.constant 0 : index
    %17 = vector.load %arg3[%c0_6, %c0_7] : memref<2x128xf32, #tpu.memory_space<vmem>>, vector<1x128xf32>
    tpu.vector_store %arg3[%c0_6, %c0_7], %16 {strides = array<i32>} : memref<2x128xf32, #tpu.memory_space<vmem>>, vector<1x128xf32>,
    %c0_8 = arith.constant 0 : index
    %c0_9 = arith.constant 0 : index
    %18 = vector.load %arg2[%c0_8, %c0_9] : memref<3x128xf32, #tpu.memory_space<vmem>>, vector<1x128xf32>
    %c3 = arith.constant 3 : index
    %19 = memref.load %arg1[%c3] : memref<8xf32, #tpu.memory_space<smem>>
    %20 = vector.broadcast %19 : f32 to vector<1x128xf32>
    %21 = arith.mulf %18, %20 : vector<1x128xf32>
    %c1_10 = arith.constant 1 : index
    %c0_11 = arith.constant 0 : index
    %22 = vector.load %arg2[%c1_10, %c0_11] : memref<3x128xf32, #tpu.memory_space<vmem>>, vector<1x128xf32>
    %c4 = arith.constant 4 : index
    %23 = memref.load %arg1[%c4] : memref<8xf32, #tpu.memory_space<smem>>
    %24 = vector.broadcast %23 : f32 to vector<1x128xf32>
    %25 = arith.mulf %22, %24 : vector<1x128xf32>
    %26 = arith.addf %21, %25 : vector<1x128xf32>
    %c2_12 = arith.constant 2 : index
    %c0_13 = arith.constant 0 : index
    %27 = vector.load %arg2[%c2_12, %c0_13] : memref<3x128xf32, #tpu.memory_space<vmem>>, vector<1x128xf32>
    %c5 = arith.constant 5 : index
    %28 = memref.load %arg1[%c5] : memref<8xf32, #tpu.memory_space<smem>>
    %29 = vector.broadcast %28 : f32 to vector<1x128xf32>
    %30 = arith.mulf %27, %29 : vector<1x128xf32>
    %31 = arith.addf %26, %30 : vector<1x128xf32>
    %c7 = arith.constant 7 : index
    %32 = memref.load %arg1[%c7] : memref<8xf32, #tpu.memory_space<smem>>
    %33 = vector.broadcast %32 : f32 to vector<1x128xf32>
    %34 = arith.addf %31, %33 : vector<1x128xf32>
    %c1_14 = arith.constant 1 : index
    %c0_15 = arith.constant 0 : index
    %35 = vector.load %arg3[%c1_14, %c0_15] : memref<2x128xf32, #tpu.memory_space<vmem>>, vector<1x128xf32>
    tpu.vector_store %arg3[%c1_14, %c0_15], %34 {strides = array<i32>} : memref<2x128xf32, #tpu.memory_space<vmem>>, vector<1x128xf32>,
    return
  }
  func.func @transform_0(%arg0: i32) -> i32 {
    %c0_i32 = arith.constant 0 : i32
    %c0_i32_0 = arith.constant 0 : i32
    return %c0_i32 : i32
  }
  func.func @transform_1(%arg0: i32) -> (i32, i32) {
    %c0_i32 = arith.constant 0 : i32
    %c0_i32_0 = arith.constant 0 : i32
    return %c0_i32, %arg0 : i32, i32
  }
  func.func @transform_2(%arg0: i32) -> (i32, i32) {
    %c0_i32 = arith.constant 0 : i32
    %c0_i32_0 = arith.constant 0 : i32
    return %c0_i32, %arg0 : i32, i32
  }
}

</mosaic_0001>

<llo_original>
// kernel: net_forward.1
$region0: #{net_forward.1}
  #allocation0 [shape = 'u32[]', space=smem, size = 0x4, offset = 0x4, fixed_abs, tag = 'smem constant byte address 0x4 - core index']
  #allocation1 [shape = 'u32[144,128]{1,0:T(1,128)}', space=vmem, size = 0x12000, scoped, tag = 'internal scratch']
  %s0 = inlined_call_operand.vmem [shape: f32[8], index: 0, kind: input, shape index: {}]
  %s1 = inlined_call_operand.vmem [shape: f32[3,128], index: 1, kind: input, shape index: {}]
  %s2 = inlined_call_operand.hbm [shape: f32[2,128], index: 2, kind: output, shape index: {}]
  %s3 = sld [smem:[#allocation0]]
  $region22: #{net_forward.1} parent=0
    _
  %s5 = ssub.s32 1, %s3
  %s6 = scalar_select 0, %s5, %s3
  $region1: #{net_forward.1} parent=0
    #allocation2 [shape = 'u8[512]{0}', space=smem, size = 0x200, scoped, tag = 'input window, operand 0, single buffered']
    #allocation3 [shape = 's32[1]{0}', space=sflag, size = 0x4, scoped, tag = 'scoped memory for net_forward.1']
    #allocation4 [shape = 's32[1]{0}', space=sflag, size = 0x4, scoped, tag = 'scoped memory for net_forward.1']
    #allocation5 [shape = 'u8[1024]{0}', space=vmem, size = 0x400, scoped, tag = 'output window, operand 0, single buffered']
    %7 = vsyncpa [#allocation4], 0
    %8 = vsyncpa [#allocation3], 0
    // Predicated region
    $region2: #{net_forward.1} parent=1 // pred_check
      _
    $region3: #{net_forward.1} parent=1 // pred_check_branch
      %10 = sbr.rel (0) target = $region5
    $region4: #{net_forward.1} parent=1 // pred_region
      %s12 = ssub.s32 16, 16
      %13 = vsyncadd [#allocation4], %s12
      %s15 = sshll.u32 %s0, 4
      %s16 = int_to_ptr.vmem [resolvable:$true] %s15
      %18 = dma.vmem_to_smem %s16, 16, [#allocation2], [#allocation4]
    $region5: #{net_forward.1} parent=1 // pred_fallthru
      _
    // Predicated region
    $region6: #{net_forward.1} parent=1 // pred_check
      _
    $region7: #{net_forward.1} parent=1 // pred_check_branch
      %20 = sbr.rel (0) target = $region9
    $region8: #{net_forward.1} parent=1 // pred_region
      _
    $region9: #{net_forward.1} parent=1 // pred_fallthru
      _
    // Predicated region
    $region10: #{net_forward.1} parent=1 // pred_check
      _
    $region11: #{net_forward.1} parent=1 // pred_check_branch
      %22 = sbr.rel (0) target = $region13
    $region12: #{net_forward.1} parent=1 // pred_region
      %23 = dma.done [#allocation4], 16
    $region13: #{net_forward.1} parent=1 // pred_fallthru
      _
    %24 = sfence
    %v25 = vld [vmem:[%s1] sm:$0x1]
    %s26 = sld [smem:[#allocation2]]
    %v27 = vstv %s26
    %v28 = vmul.f32 %v25, %v27
    %v29 = vld [vmem:[%s1 + $0x1] sm:$0x1]
    %s30 = sld [smem:[#allocation2 + $0x1]]
    %v31 = vstv %s30
    %v32 = vmul.f32 %v29, %v31
    %v33 = vadd.f32 %v28, %v32
    %v34 = vld [vmem:[%s1 + $0x2] sm:$0x1]
    %s35 = sld [smem:[#allocation2 + $0x2]]
    %v36 = vstv %s35
    %v37 = vmul.f32 %v34, %v36
    %v38 = vadd.f32 %v33, %v37
    %s39 = sld [smem:[#allocation2 + $0x6]]
    %v40 = vstv %s39
    %v41 = vadd.f32 %v38, %v40
    %42 = vst [vmem:[#allocation5] sm:$0x1] %v41
    %v43 = vld [vmem:[%s1] sm:$0x1]
    %s44 = sld [smem:[#allocation2 + $0x3]]
    %v45 = vstv %s44
    %v46 = vmul.f32 %v43, %v45
    %v47 = vld [vmem:[%s1 + $0x1] sm:$0x1]
    %s48 = sld [smem:[#allocation2 + $0x4]]
    %v49 = vstv %s48
    %v50 = vmul.f32 %v47, %v49
    %v51 = vadd.f32 %v46, %v50
    %v52 = vld [vmem:[%s1 + $0x2] sm:$0x1]
    %s53 = sld [smem:[#allocation2 + $0x5]]
    %v54 = vstv %s53
    %v55 = vmul.f32 %v52, %v54
    %v56 = vadd.f32 %v51, %v55
    %s57 = sld [smem:[#allocation2 + $0x7]]
    %v58 = vstv %s57
    %v59 = vadd.f32 %v56, %v58
    %60 = vst [vmem:[#allocation5 + $0x1] sm:$0x1] %v59
    // Predicated region
    $region14: #{net_forward.1} parent=1 // pred_check
      _
    $region15: #{net_forward.1} parent=1 // pred_check_branch
      %62 = sbr.rel (0) target = $region17
    $region16: #{net_forward.1} parent=1 // pred_region
      %s64 = ssub.s32 32, 32
      %65 = vsyncadd [#allocation3], %s64
      %s67 = sshll.u32 [#allocation5], 4
      %s68 = int_to_ptr.vmem [resolvable:$true] %s67
      %70 = dma.vmem_to_hbm [thread:$0]  %s68, 32, %s2, [#allocation3]
    $region17: #{net_forward.1} parent=1 // pred_fallthru
      _
    // Predicated region
    $region18: #{net_forward.1} parent=1 // pred_check
      _
    $region19: #{net_forward.1} parent=1 // pred_check_branch
      %72 = sbr.rel (0) target = $region21
    $region20: #{net_forward.1} parent=1 // pred_region
      %73 = dma.done [#allocation3], 32
    $region21: #{net_forward.1} parent=1 // pred_fallthru
      _
    %74 = vsyncpa [#allocation3], 1
    %75 = vsyncpa [#allocation4], 1

</llo_original>
